<compile_context>
chip_gen: v6e
topology: v6e:2x2x1
jax: 0.10.0
libtpu: 0.0.40
codegen_flags: <defaults>
</compile_context>

<pallas_src>
import functools

import jax
import jax.numpy as jnp
from jax import lax
from jax.experimental import pallas as pl
from jax.experimental.pallas import tpu as pltpu

SUB = 8               # sublanes per f32 vreg
LANE = 128            # lanes per vreg
CHUNK_ROWS = 64       # inner-loop chunk: (64, 128) f32 = 8 vregs per stream
PAD_LOGIT = -100.0    # sigmoid(-100) ~ 0 and clamped BCE(-100, 0) == 0
LOG_CLAMP = -100.0    # matches torch.F.binary_cross_entropy's log clamp


def _dice_bce_kernel(x_ref, t_ref, acc_ref, *, rows_total, block_rows,
                     blocks_per_split):
    """Accumulates per-lane partial sums for the DiceBCE reductions.

    x_ref : (block_rows, 128) logits block (native dtype, upcast per chunk)
    t_ref : (block_rows, 128) targets block (f32/bf16/int8, upcast per chunk)
    acc_ref : (1, 4, 8, 128) f32 resident accumulator; slabs are
              [p*t, p, t, bce] per-lane partial sums for this grid split.
    """
    split = pl.program_id(0)
    step = pl.program_id(1)

    @pl.when(step == 0)
    def _():
        acc_ref[...] = jnp.zeros_like(acc_ref)

    n_chunks = block_rows // CHUNK_ROWS
    g = split * blocks_per_split + step           # global block index
    valid_rows = rows_total - g * block_rows      # in-bounds rows of this block
    block_full = valid_rows >= block_rows

    def accumulate(masked):
        def body(ci, carry):
            r0 = pl.multiple_of(ci * CHUNK_ROWS, CHUNK_ROWS)
            x = x_ref[pl.ds(r0, CHUNK_ROWS), :].astype(jnp.float32)
            t = t_ref[pl.ds(r0, CHUNK_ROWS), :].astype(jnp.float32)
            if masked:
                # Neutralize garbage rows of a partial / redundant block.
                ridx = r0 + lax.broadcasted_iota(jnp.int32, (CHUNK_ROWS, LANE), 0)
                keep = ridx < valid_rows
                x = jnp.where(keep, x, PAD_LOGIT)
                t = jnp.where(keep, t, 0.0)

            # Shared transcendental: e = exp(-|x|)   (EUP)
            e = jnp.exp(-jnp.abs(x))
            d = 1.0 + e
            r = pl.reciprocal(d, approx=True)         # EUP
            r = r * (2.0 - d * r)                     # one Newton step -> ~f32
            p = jnp.where(x >= 0.0, 1.0, e) * r       # sigmoid(x)

            # Clamped BCE (matches torch F.binary_cross_entropy):
            #   log p     = min(x, 0) - log1p(e)
            #   log (1-p) = -max(x, 0) - log1p(e)
            log1pe = jnp.log1p(e)                     # EUP
            log_p = jnp.minimum(x, 0.0) - log1pe
            log_1mp = -jnp.maximum(x, 0.0) - log1pe
            bce = -(t * jnp.maximum(log_p, LOG_CLAMP)
                    + (1.0 - t) * jnp.maximum(log_1mp, LOG_CLAMP))

            def fold(v):
                # (64,128) -> (8,8,128) is layout-preserving; axis-0 sum is 7
                # plain vreg adds -> one (8,128) vreg. No VMEM temporaries.
                return v.reshape(CHUNK_ROWS // SUB, SUB, LANE).sum(axis=0)

            pt, ps, ts, bs = carry
            return (pt + fold(p * t), ps + fold(p), ts + fold(t), bs + fold(bce))

        zero = jnp.zeros((SUB, LANE), jnp.float32)
        pt, ps, ts, bs = lax.fori_loop(0, n_chunks, body, (zero, zero, zero, zero),
                                       unroll=not masked)
        acc_ref[0, 0] += pt   # intersection
        acc_ref[0, 1] += ps   # sum(sigmoid)
        acc_ref[0, 2] += ts   # sum(targets)
        acc_ref[0, 3] += bs   # sum(BCE elementwise)

    # Hot path (all rows valid) stays mask-free; cold path handles the one
    # partial tail block per split and any fully-redundant clamped block.
    @pl.when(block_full)
    def _():
        accumulate(masked=False)

    @pl.when(jnp.logical_not(block_full))
    def _():
        accumulate(masked=True)


@functools.partial(jax.jit, static_argnames=("smooth", "loss_weight"))
def dice_bce_loss(inputs, targets, smooth=1.0, loss_weight=3.0):
    """JAX/Pallas equivalent of DiceBCELoss.forward (returns dict of scalars)."""
    n = inputs.size
    if n == 0:
        raise ValueError("dice_bce_loss requires a non-empty input")
    if targets.size != n:
        raise ValueError("inputs and targets must have the same number of elements")

    x = inputs.reshape(-1)
    t = targets.reshape(-1)
    if not jnp.issubdtype(x.dtype, jnp.floating):
        x = x.astype(jnp.float32)
    if not (jnp.issubdtype(t.dtype, jnp.floating) or t.dtype == jnp.int8):
        # bool / wide-int labels: stream 1 byte/elem, upcast inside the kernel.
        t = t.astype(jnp.int8)

    rows_raw = pl.cdiv(n, LANE)
    rows = max(rows_raw, CHUNK_ROWS)      # at least one full 64-row chunk
    padded_len = rows * LANE
    if padded_len != n:
        # TODO(synk): only n % 128 != 0 (or n < 8192) hits this pad copy; a
        # fully copy-free ragged path would need manual 1-D HBM DMA.
        x = jnp.pad(x, (0, padded_len - n), constant_values=PAD_LOGIT)
        t = jnp.pad(t, (0, padded_len - n), constant_values=0)
    x2 = x.reshape(rows, LANE)
    t2 = t.reshape(rows, LANE)

    # ~1 MiB logits per buffer; bigger rows for narrow logits.
    max_rows = 2048 if x2.dtype.itemsize >= 4 else 4096
    block_rows = min(max_rows, (rows // CHUNK_ROWS) * CHUNK_ROWS)
    num_blocks = pl.cdiv(rows, block_rows)

    # Two-way "parallel" split so v7x megacore can use both TensorCores
    # (no-op cost on single-TC v5e/v6e).  If profiling shows one idle TC on
    # v7x, switch the leading axis to pltpu.CORE_PARALLEL.
    num_splits = 2 if num_blocks >= 2 else 1
    blocks_per_split = pl.cdiv(num_blocks, num_splits)

    kernel = functools.partial(
        _dice_bce_kernel, rows_total=rows, block_rows=block_rows,
        blocks_per_split=blocks_per_split)

    def in_idx(c, i):
        # Clamp so a redundant trailing step (odd num_blocks split two ways)
        # just re-reads the last in-bounds block; the kernel fully masks it.
        return (jnp.minimum(c * blocks_per_split + i, num_blocks - 1), 0)

    in_spec_x = pl.BlockSpec((block_rows, LANE), in_idx)
    in_spec_t = pl.BlockSpec((block_rows, LANE), in_idx)
    out_spec = pl.BlockSpec((1, 4, SUB, LANE), lambda c, i: (c, 0, 0, 0))
    out_shape = jax.ShapeDtypeStruct((num_splits, 4, SUB, LANE), jnp.float32)

    cost = pl.CostEstimate(
        flops=25 * padded_len,
        transcendentals=3 * padded_len,
        bytes_accessed=(x2.size * x2.dtype.itemsize
                        + t2.size * t2.dtype.itemsize
                        + num_splits * 4 * SUB * LANE * 4))

    acc = pl.pallas_call(
        kernel,
        out_shape=out_shape,
        grid_spec=pltpu.PrefetchScalarGridSpec(
            num_scalar_prefetch=0,
            grid=(num_splits, blocks_per_split),
            in_specs=[in_spec_x, in_spec_t],
            out_specs=out_spec),
        compiler_params=pltpu.CompilerParams(
            dimension_semantics=("parallel", "arbitrary"),
            vmem_limit_bytes=32 * 1024 * 1024),
        cost_estimate=cost,
    )(x2, t2)

    # Tiny final reduction of the per-lane / per-split partial sums.
    sums = jnp.sum(acc, axis=(0, 2, 3))               # (4,)
    inter, psum, tsum, bce_sum = sums[0], sums[1], sums[2], sums[3]

    bce = bce_sum / jnp.float32(n)                     # mean reduction
    dice_loss = 1.0 - (2.0 * inter + smooth) / (psum + tsum + smooth)
    total = bce + dice_loss * loss_weight
    return {"BCE": bce, "dice": dice_loss, "total": total}


def _reference(inputs, targets, smooth=1.0, loss_weight=3.0):
    p = jax.nn.sigmoid(inputs.astype(jnp.float32)).reshape(-1)
    t = targets.reshape(-1).astype(jnp.float32)
    inter = jnp.sum(p * t)
    dice = 1.0 - (2.0 * inter + smooth) / (jnp.sum(p) + jnp.sum(t) + smooth)
    bce = jnp.mean(-(t * jnp.maximum(jnp.log(p), -100.0)
                     + (1.0 - t) * jnp.maximum(jnp.log1p(-p), -100.0)))
    return {"BCE": bce, "dice": dice, "total": bce + dice * loss_weight}


if __name__ == "__main__":
    key = jax.random.PRNGKey(0)
    k1, k2 = jax.random.split(key)

    # 1) Small NCHW logits + binary f32 targets (single-block path).
    x = jax.random.normal(k1, (2, 4, 16, 16), dtype=jnp.float32)
    tgt = (jax.random.uniform(k2, (2, 4, 16, 16)) > 0.5).astype(jnp.float32)
    out = dice_bce_loss(x, tgt)
    jax.block_until_ready(out["total"])
    ref = _reference(x, tgt)
    for kname in ("BCE", "dice", "total"):
        assert abs(float(out[kname]) - float(ref[kname])) < 1e-4, (
            kname, out[kname], ref[kname])

    # 2) Ragged bf16 logits (lane pad + masked tail block + 2-way split).
    xb = jax.random.normal(k1, (3, 5, 33, 47), dtype=jnp.bfloat16)
    tb = (jax.random.uniform(k2, (3, 5, 33, 47)) > 0.5).astype(jnp.float32)
    lb = dice_bce_loss(xb, tb)
    jax.block_until_ready(lb["total"])
    rb = _reference(xb, tb)
    for kname in ("BCE", "dice", "total"):
        assert abs(float(lb[kname]) - float(rb[kname])) < 5e-3, (
            kname, lb[kname], rb[kname])

    # 3) 128-aligned f32 logits + bool targets: zero-copy path, int8 target
    #    stream, unrolled full blocks, masked partial block, clamped redundant
    #    block (odd block count split across the 2-way parallel axis).
    xc = jax.random.normal(k1, (2, 4104, 64), dtype=jnp.float32)
    tc = jax.random.uniform(k2, (2, 4104, 64)) > 0.5          # bool labels
    lc = dice_bce_loss(xc, tc)
    jax.block_until_ready(lc["total"])
    rc = _reference(xc, tc.astype(jnp.float32))
    for kname in ("BCE", "dice", "total"):
        assert abs(float(lc[kname]) - float(rc[kname])) < 2e-3, (
            kname, lc[kname], rc[kname])

    print("KERNEL_OK")
</pallas_src>

<mosaic_0001>
module attributes {stable_mosaic.version = 11 : i64} {
  func.func @_dice_bce_kernel(%arg0: i32, %arg1: i32, %arg2: memref<64x128xf32, #tpu.memory_space<vmem>>, %arg3: memref<64x128xf32, #tpu.memory_space<vmem>>, %arg4: memref<1x4x8x128xf32, #tpu.memory_space<vmem>>) attributes {dimension_semantics = [#tpu.dimension_semantics<parallel>, #tpu.dimension_semantics<arbitrary>], iteration_bounds = array<i64: 1, 1>, scalar_prefetch = 0 : i64, scratch_operands = 0 : i64, tpu.core_type = #tpu.core_type<tc>, window_params = [{transform_indices = @transform_0, window_bounds = array<i64: 64, 128>}, {transform_indices = @transform_1, window_bounds = array<i64: 64, 128>}, {transform_indices = @transform_2, window_bounds = array<i64: 1, 4, 8, 128>}]} {
    %c0_i32 = arith.constant 0 : i32
    %0 = arith.cmpi eq, %arg1, %c0_i32 : i32
    %1 = arith.extui %0 : i1 to i32
    %c0_i32_0 = arith.constant 0 : i32
    %2 = arith.cmpi ne, %1, %c0_i32_0 : i32
    scf.if %2 {
      %cst = arith.constant 0.000000e+00 : f32
      %13 = vector.broadcast %cst : f32 to vector<1x4x8x128xf32>
      %c0 = arith.constant 0 : index
      %c0_5 = arith.constant 0 : index
      %c0_6 = arith.constant 0 : index
      %c0_7 = arith.constant 0 : index
      %14 = vector.load %arg4[%c0, %c0_5, %c0_6, %c0_7] : memref<1x4x8x128xf32, #tpu.memory_space<vmem>>, vector<1x4x8x128xf32>
      tpu.vector_store %arg4[%c0, %c0_5, %c0_6, %c0_7], %13 {strides = array<i32>} : memref<1x4x8x128xf32, #tpu.memory_space<vmem>>, vector<1x4x8x128xf32>,
    } else {
    }
    %c1_i32 = arith.constant 1 : i32
    %3 = arith.muli %arg0, %c1_i32 : i32
    %4 = arith.addi %3, %arg1 : i32
    %c64_i32 = arith.constant 64 : i32
    %5 = arith.muli %4, %c64_i32 : i32
    %c64_i32_1 = arith.constant 64 : i32
    %6 = arith.subi %c64_i32_1, %5 : i32
    %c64_i32_2 = arith.constant 64 : i32
    %7 = arith.cmpi sge, %6, %c64_i32_2 : i32
    %8 = arith.extui %7 : i1 to i32
    %c0_i32_3 = arith.constant 0 : i32
    %9 = arith.cmpi ne, %8, %c0_i32_3 : i32
    scf.if %9 {
      %cst = arith.constant 0.000000e+00 : f32
      %13 = vector.broadcast %cst : f32 to vector<8x128xf32>
      %c0_i32_5 = arith.constant 0 : i32
      %c64_i32_6 = arith.constant 64 : i32
      %14 = arith.muli %c0_i32_5, %c64_i32_6 : i32
      %15 = tpu.assume_multiple %14, 64 : i32
      %16 = arith.index_cast %15 : i32 to index
      %c0 = arith.constant 0 : index
      %17 = vector.load %arg2[%16, %c0] : memref<64x128xf32, #tpu.memory_space<vmem>>, vector<64x128xf32>
      %18 = arith.index_cast %15 : i32 to index
      %c0_7 = arith.constant 0 : index
      %19 = vector.load %arg3[%18, %c0_7] : memref<64x128xf32, #tpu.memory_space<vmem>>, vector<64x128xf32>
      %20 = math.absf %17 : vector<64x128xf32>
      %cst_8 = arith.constant 0.000000e+00 : f32
      %21 = vector.broadcast %cst_8 : f32 to vector<64x128xf32>
      %22 = arith.subf %21, %20 : vector<64x128xf32>
      %23 = math.exp %22 : vector<64x128xf32>
      %cst_9 = arith.constant 1.000000e+00 : f32
      %24 = vector.broadcast %cst_9 : f32 to vector<64x128xf32>
      %25 = arith.addf %24, %23 : vector<64x128xf32>
      %26 = tpu.reciprocal %25 {approx = true} : vector<64x128xf32> -> vector<64x128xf32>
      %27 = arith.mulf %25, %26 : vector<64x128xf32>
      %cst_10 = arith.constant 2.000000e+00 : f32
      %28 = vector.broadcast %cst_10 : f32 to vector<64x128xf32>
      %29 = arith.subf %28, %27 : vector<64x128xf32>
      %30 = arith.mulf %26, %29 : vector<64x128xf32>
      %cst_11 = arith.constant 0.000000e+00 : f32
      %31 = vector.broadcast %cst_11 : f32 to vector<64x128xf32>
      %32 = arith.cmpf oge, %17, %31 : vector<64x128xf32>
      %cst_12 = arith.constant 1.000000e+00 : f32
      %33 = vector.broadcast %cst_12 : f32 to vector<64x128xf32>
      %34 = arith.select %32, %33, %23 : vector<64x128xi1>, vector<64x128xf32>
      %35 = arith.mulf %34, %30 : vector<64x128xf32>
      %36 = math.log1p %23 : vector<64x128xf32>
      %cst_13 = arith.constant 0.000000e+00 : f32
      %37 = vector.broadcast %cst_13 : f32 to vector<64x128xf32>
      %38 = arith.minimumf %17, %37 : vector<64x128xf32>
      %39 = arith.subf %38, %36 : vector<64x128xf32>
      %cst_14 = arith.constant 0.000000e+00 : f32
      %40 = vector.broadcast %cst_14 : f32 to vector<64x128xf32>
      %41 = arith.maximumf %17, %40 : vector<64x128xf32>
      %cst_15 = arith.constant 0.000000e+00 : f32
      %42 = vector.broadcast %cst_15 : f32 to vector<64x128xf32>
      %43 = arith.subf %42, %41 : vector<64x128xf32>
      %44 = arith.subf %43, %36 : vector<64x128xf32>
      %cst_16 = arith.constant -1.000000e+02 : f32
      %45 = vector.broadcast %cst_16 : f32 to vector<64x128xf32>
      %46 = arith.maximumf %39, %45 : vector<64x128xf32>
      %47 = arith.mulf %19, %46 : vector<64x128xf32>
      %cst_17 = arith.constant 1.000000e+00 : f32
      %48 = vector.broadcast %cst_17 : f32 to vector<64x128xf32>
      %49 = arith.subf %48, %19 : vector<64x128xf32>
      %cst_18 = arith.constant -1.000000e+02 : f32
      %50 = vector.broadcast %cst_18 : f32 to vector<64x128xf32>
      %51 = arith.maximumf %44, %50 : vector<64x128xf32>
      %52 = arith.mulf %49, %51 : vector<64x128xf32>
      %53 = arith.addf %47, %52 : vector<64x128xf32>
      %cst_19 = arith.constant 0.000000e+00 : f32
      %54 = vector.broadcast %cst_19 : f32 to vector<64x128xf32>
      %55 = arith.subf %54, %53 : vector<64x128xf32>
      %56 = arith.mulf %35, %19 : vector<64x128xf32>
      %57 = vector.shape_cast %56 : vector<64x128xf32> to vector<8x8x128xf32>
      %cst_20 = arith.constant dense<0.000000e+00> : vector<8x128xf32>
      %58 = vector.multi_reduction <add>, %57, %cst_20 [0] : vector<8x8x128xf32> to vector<8x128xf32>
      %59 = arith.addf %13, %58 : vector<8x128xf32>
      %60 = vector.shape_cast %35 : vector<64x128xf32> to vector<8x8x128xf32>
      %cst_21 = arith.constant dense<0.000000e+00> : vector<8x128xf32>
      %61 = vector.multi_reduction <add>, %60, %cst_21 [0] : vector<8x8x128xf32> to vector<8x128xf32>
      %62 = arith.addf %13, %61 : vector<8x128xf32>
      %63 = vector.shape_cast %19 : vector<64x128xf32> to vector<8x8x128xf32>
      %cst_22 = arith.constant dense<0.000000e+00> : vector<8x128xf32>
      %64 = vector.multi_reduction <add>, %63, %cst_22 [0] : vector<8x8x128xf32> to vector<8x128xf32>
      %65 = arith.addf %13, %64 : vector<8x128xf32>
      %66 = vector.shape_cast %55 : vector<64x128xf32> to vector<8x8x128xf32>
      %cst_23 = arith.constant dense<0.000000e+00> : vector<8x128xf32>
      %67 = vector.multi_reduction <add>, %66, %cst_23 [0] : vector<8x8x128xf32> to vector<8x128xf32>
      %68 = arith.addf %13, %67 : vector<8x128xf32>
      %c1_i32_24 = arith.constant 1 : i32
      %c0_25 = arith.constant 0 : index
      %c0_26 = arith.constant 0 : index
      %c0_27 = arith.constant 0 : index
      %c0_28 = arith.constant 0 : index
      %69 = vector.load %arg4[%c0_25, %c0_26, %c0_27, %c0_28] : memref<1x4x8x128xf32, #tpu.memory_space<vmem>>, vector<1x1x8x128xf32>
      %70 = vector.shape_cast %69 : vector<1x1x8x128xf32> to vector<8x128xf32>
      %71 = arith.addf %70, %59 : vector<8x128xf32>
      %c0_29 = arith.constant 0 : index
      %c0_30 = arith.constant 0 : index
      %c0_31 = arith.constant 0 : index
      %c0_32 = arith.constant 0 : index
      %72 = vector.load %arg4[%c0_29, %c0_30, %c0_31, %c0_32] : memref<1x4x8x128xf32, #tpu.memory_space<vmem>>, vector<1x1x8x128xf32>
      %73 = vector.shape_cast %72 : vector<1x1x8x128xf32> to vector<8x128xf32>
      %74 = vector.shape_cast %71 : vector<8x128xf32> to vector<1x1x8x128xf32>
      tpu.vector_store %arg4[%c0_29, %c0_30, %c0_31, %c0_32], %74 {strides = array<i32>} : memref<1x4x8x128xf32, #tpu.memory_space<vmem>>, vector<1x1x8x128xf32>,
      %c0_33 = arith.constant 0 : index
      %c1 = arith.constant 1 : index
      %c0_34 = arith.constant 0 : index
      %c0_35 = arith.constant 0 : index
      %75 = vector.load %arg4[%c0_33, %c1, %c0_34, %c0_35] : memref<1x4x8x128xf32, #tpu.memory_space<vmem>>, vector<1x1x8x128xf32>
      %76 = vector.shape_cast %75 : vector<1x1x8x128xf32> to vector<8x128xf32>
      %77 = arith.addf %76, %62 : vector<8x128xf32>
      %c0_36 = arith.constant 0 : index
      %c1_37 = arith.constant 1 : index
      %c0_38 = arith.constant 0 : index
      %c0_39 = arith.constant 0 : index
      %78 = vector.load %arg4[%c0_36, %c1_37, %c0_38, %c0_39] : memref<1x4x8x128xf32, #tpu.memory_space<vmem>>, vector<1x1x8x128xf32>
      %79 = vector.shape_cast %78 : vector<1x1x8x128xf32> to vector<8x128xf32>
      %80 = vector.shape_cast %77 : vector<8x128xf32> to vector<1x1x8x128xf32>
      tpu.vector_store %arg4[%c0_36, %c1_37, %c0_38, %c0_39], %80 {strides = array<i32>} : memref<1x4x8x128xf32, #tpu.memory_space<vmem>>, vector<1x1x8x128xf32>,
      %c0_40 = arith.constant 0 : index
      %c2 = arith.constant 2 : index
      %c0_41 = arith.constant 0 : index
      %c0_42 = arith.constant 0 : index
      %81 = vector.load %arg4[%c0_40, %c2, %c0_41, %c0_42] : memref<1x4x8x128xf32, #tpu.memory_space<vmem>>, vector<1x1x8x128xf32>
      %82 = vector.shape_cast %81 : vector<1x1x8x128xf32> to vector<8x128xf32>
      %83 = arith.addf %82, %65 : vector<8x128xf32>
      %c0_43 = arith.constant 0 : index
      %c2_44 = arith.constant 2 : index
      %c0_45 = arith.constant 0 : index
      %c0_46 = arith.constant 0 : index
      %84 = vector.load %arg4[%c0_43, %c2_44, %c0_45, %c0_46] : memref<1x4x8x128xf32, #tpu.memory_space<vmem>>, vector<1x1x8x128xf32>
      %85 = vector.shape_cast %84 : vector<1x1x8x128xf32> to vector<8x128xf32>
      %86 = vector.shape_cast %83 : vector<8x128xf32> to vector<1x1x8x128xf32>
      tpu.vector_store %arg4[%c0_43, %c2_44, %c0_45, %c0_46], %86 {strides = array<i32>} : memref<1x4x8x128xf32, #tpu.memory_space<vmem>>, vector<1x1x8x128xf32>,
      %c0_47 = arith.constant 0 : index
      %c3 = arith.constant 3 : index
      %c0_48 = arith.constant 0 : index
      %c0_49 = arith.constant 0 : index
      %87 = vector.load %arg4[%c0_47, %c3, %c0_48, %c0_49] : memref<1x4x8x128xf32, #tpu.memory_space<vmem>>, vector<1x1x8x128xf32>
      %88 = vector.shape_cast %87 : vector<1x1x8x128xf32> to vector<8x128xf32>
      %89 = arith.addf %88, %68 : vector<8x128xf32>
      %c0_50 = arith.constant 0 : index
      %c3_51 = arith.constant 3 : index
      %c0_52 = arith.constant 0 : index
      %c0_53 = arith.constant 0 : index
      %90 = vector.load %arg4[%c0_50, %c3_51, %c0_52, %c0_53] : memref<1x4x8x128xf32, #tpu.memory_space<vmem>>, vector<1x1x8x128xf32>
      %91 = vector.shape_cast %90 : vector<1x1x8x128xf32> to vector<8x128xf32>
      %92 = vector.shape_cast %89 : vector<8x128xf32> to vector<1x1x8x128xf32>
      tpu.vector_store %arg4[%c0_50, %c3_51, %c0_52, %c0_53], %92 {strides = array<i32>} : memref<1x4x8x128xf32, #tpu.memory_space<vmem>>, vector<1x1x8x128xf32>,
    } else {
    }
    %true = arith.constant true
    %10 = arith.xori %7, %true : i1
    %11 = arith.extui %10 : i1 to i32
    %c0_i32_4 = arith.constant 0 : i32
    %12 = arith.cmpi ne, %11, %c0_i32_4 : i32
    scf.if %12 {
      %cst = arith.constant 0.000000e+00 : f32
      %13 = vector.broadcast %cst : f32 to vector<8x128xf32>
      %c0_i32_5 = arith.constant 0 : i32
      %c64_i32_6 = arith.constant 64 : i32
      %14 = arith.muli %c0_i32_5, %c64_i32_6 : i32
      %15 = tpu.assume_multiple %14, 64 : i32
      %16 = arith.index_cast %15 : i32 to index
      %c0 = arith.constant 0 : index
      %17 = vector.load %arg2[%16, %c0] : memref<64x128xf32, #tpu.memory_space<vmem>>, vector<64x128xf32>
      %18 = arith.index_cast %15 : i32 to index
      %c0_7 = arith.constant 0 : index
      %19 = vector.load %arg3[%18, %c0_7] : memref<64x128xf32, #tpu.memory_space<vmem>>, vector<64x128xf32>
      %20 = tpu.iota {dimensions = array<i32: 0>} : vector<64x128xi32>
      %21 = vector.broadcast %15 : i32 to vector<64x128xi32>
      %22 = arith.addi %21, %20 : vector<64x128xi32>
      %23 = vector.broadcast %6 : i32 to vector<64x128xi32>
      %24 = arith.cmpi slt, %22, %23 : vector<64x128xi32>
      %cst_8 = arith.constant -1.000000e+02 : f32
      %25 = vector.broadcast %cst_8 : f32 to vector<64x128xf32>
      %26 = arith.select %24, %17, %25 : vector<64x128xi1>, vector<64x128xf32>
      %cst_9 = arith.constant 0.000000e+00 : f32
      %27 = vector.broadcast %cst_9 : f32 to vector<64x128xf32>
      %28 = arith.select %24, %19, %27 : vector<64x128xi1>, vector<64x128xf32>
      %29 = math.absf %26 : vector<64x128xf32>
      %cst_10 = arith.constant 0.000000e+00 : f32
      %30 = vector.broadcast %cst_10 : f32 to vector<64x128xf32>
      %31 = arith.subf %30, %29 : vector<64x128xf32>
      %32 = math.exp %31 : vector<64x128xf32>
      %cst_11 = arith.constant 1.000000e+00 : f32
      %33 = vector.broadcast %cst_11 : f32 to vector<64x128xf32>
      %34 = arith.addf %33, %32 : vector<64x128xf32>
      %35 = tpu.reciprocal %34 {approx = true} : vector<64x128xf32> -> vector<64x128xf32>
      %36 = arith.mulf %34, %35 : vector<64x128xf32>
      %cst_12 = arith.constant 2.000000e+00 : f32
      %37 = vector.broadcast %cst_12 : f32 to vector<64x128xf32>
      %38 = arith.subf %37, %36 : vector<64x128xf32>
      %39 = arith.mulf %35, %38 : vector<64x128xf32>
      %cst_13 = arith.constant 0.000000e+00 : f32
      %40 = vector.broadcast %cst_13 : f32 to vector<64x128xf32>
      %41 = arith.cmpf oge, %26, %40 : vector<64x128xf32>
      %cst_14 = arith.constant 1.000000e+00 : f32
      %42 = vector.broadcast %cst_14 : f32 to vector<64x128xf32>
      %43 = arith.select %41, %42, %32 : vector<64x128xi1>, vector<64x128xf32>
      %44 = arith.mulf %43, %39 : vector<64x128xf32>
      %45 = math.log1p %32 : vector<64x128xf32>
      %cst_15 = arith.constant 0.000000e+00 : f32
      %46 = vector.broadcast %cst_15 : f32 to vector<64x128xf32>
      %47 = arith.minimumf %26, %46 : vector<64x128xf32>
      %48 = arith.subf %47, %45 : vector<64x128xf32>
      %cst_16 = arith.constant 0.000000e+00 : f32
      %49 = vector.broadcast %cst_16 : f32 to vector<64x128xf32>
      %50 = arith.maximumf %26, %49 : vector<64x128xf32>
      %cst_17 = arith.constant 0.000000e+00 : f32
      %51 = vector.broadcast %cst_17 : f32 to vector<64x128xf32>
      %52 = arith.subf %51, %50 : vector<64x128xf32>
      %53 = arith.subf %52, %45 : vector<64x128xf32>
      %cst_18 = arith.constant -1.000000e+02 : f32
      %54 = vector.broadcast %cst_18 : f32 to vector<64x128xf32>
      %55 = arith.maximumf %48, %54 : vector<64x128xf32>
      %56 = arith.mulf %28, %55 : vector<64x128xf32>
      %cst_19 = arith.constant 1.000000e+00 : f32
      %57 = vector.broadcast %cst_19 : f32 to vector<64x128xf32>
      %58 = arith.subf %57, %28 : vector<64x128xf32>
      %cst_20 = arith.constant -1.000000e+02 : f32
      %59 = vector.broadcast %cst_20 : f32 to vector<64x128xf32>
      %60 = arith.maximumf %53, %59 : vector<64x128xf32>
      %61 = arith.mulf %58, %60 : vector<64x128xf32>
      %62 = arith.addf %56, %61 : vector<64x128xf32>
      %cst_21 = arith.constant 0.000000e+00 : f32
      %63 = vector.broadcast %cst_21 : f32 to vector<64x128xf32>
      %64 = arith.subf %63, %62 : vector<64x128xf32>
      %65 = arith.mulf %44, %28 : vector<64x128xf32>
      %66 = vector.shape_cast %65 : vector<64x128xf32> to vector<8x8x128xf32>
      %cst_22 = arith.constant dense<0.000000e+00> : vector<8x128xf32>
      %67 = vector.multi_reduction <add>, %66, %cst_22 [0] : vector<8x8x128xf32> to vector<8x128xf32>
      %68 = arith.addf %13, %67 : vector<8x128xf32>
      %69 = vector.shape_cast %44 : vector<64x128xf32> to vector<8x8x128xf32>
      %cst_23 = arith.constant dense<0.000000e+00> : vector<8x128xf32>
      %70 = vector.multi_reduction <add>, %69, %cst_23 [0] : vector<8x8x128xf32> to vector<8x128xf32>
      %71 = arith.addf %13, %70 : vector<8x128xf32>
      %72 = vector.shape_cast %28 : vector<64x128xf32> to vector<8x8x128xf32>
      %cst_24 = arith.constant dense<0.000000e+00> : vector<8x128xf32>
      %73 = vector.multi_reduction <add>, %72, %cst_24 [0] : vector<8x8x128xf32> to vector<8x128xf32>
      %74 = arith.addf %13, %73 : vector<8x128xf32>
      %75 = vector.shape_cast %64 : vector<64x128xf32> to vector<8x8x128xf32>
      %cst_25 = arith.constant dense<0.000000e+00> : vector<8x128xf32>
      %76 = vector.multi_reduction <add>, %75, %cst_25 [0] : vector<8x8x128xf32> to vector<8x128xf32>
      %77 = arith.addf %13, %76 : vector<8x128xf32>
      %c1_i32_26 = arith.constant 1 : i32
      %c0_27 = arith.constant 0 : index
      %c0_28 = arith.constant 0 : index
      %c0_29 = arith.constant 0 : index
      %c0_30 = arith.constant 0 : index
      %78 = vector.load %arg4[%c0_27, %c0_28, %c0_29, %c0_30] : memref<1x4x8x128xf32, #tpu.memory_space<vmem>>, vector<1x1x8x128xf32>
      %79 = vector.shape_cast %78 : vector<1x1x8x128xf32> to vector<8x128xf32>
      %80 = arith.addf %79, %68 : vector<8x128xf32>
      %c0_31 = arith.constant 0 : index
      %c0_32 = arith.constant 0 : index
      %c0_33 = arith.constant 0 : index
      %c0_34 = arith.constant 0 : index
      %81 = vector.load %arg4[%c0_31, %c0_32, %c0_33, %c0_34] : memref<1x4x8x128xf32, #tpu.memory_space<vmem>>, vector<1x1x8x128xf32>
      %82 = vector.shape_cast %81 : vector<1x1x8x128xf32> to vector<8x128xf32>
      %83 = vector.shape_cast %80 : vector<8x128xf32> to vector<1x1x8x128xf32>
      tpu.vector_store %arg4[%c0_31, %c0_32, %c0_33, %c0_34], %83 {strides = array<i32>} : memref<1x4x8x128xf32, #tpu.memory_space<vmem>>, vector<1x1x8x128xf32>,
      %c0_35 = arith.constant 0 : index
      %c1 = arith.constant 1 : index
      %c0_36 = arith.constant 0 : index
      %c0_37 = arith.constant 0 : index
      %84 = vector.load %arg4[%c0_35, %c1, %c0_36, %c0_37] : memref<1x4x8x128xf32, #tpu.memory_space<vmem>>, vector<1x1x8x128xf32>
      %85 = vector.shape_cast %84 : vector<1x1x8x128xf32> to vector<8x128xf32>
      %86 = arith.addf %85, %71 : vector<8x128xf32>
      %c0_38 = arith.constant 0 : index
      %c1_39 = arith.constant 1 : index
      %c0_40 = arith.constant 0 : index
      %c0_41 = arith.constant 0 : index
      %87 = vector.load %arg4[%c0_38, %c1_39, %c0_40, %c0_41] : memref<1x4x8x128xf32, #tpu.memory_space<vmem>>, vector<1x1x8x128xf32>
      %88 = vector.shape_cast %87 : vector<1x1x8x128xf32> to vector<8x128xf32>
      %89 = vector.shape_cast %86 : vector<8x128xf32> to vector<1x1x8x128xf32>
      tpu.vector_store %arg4[%c0_38, %c1_39, %c0_40, %c0_41], %89 {strides = array<i32>} : memref<1x4x8x128xf32, #tpu.memory_space<vmem>>, vector<1x1x8x128xf32>,
      %c0_42 = arith.constant 0 : index
      %c2 = arith.constant 2 : index
      %c0_43 = arith.constant 0 : index
      %c0_44 = arith.constant 0 : index
      %90 = vector.load %arg4[%c0_42, %c2, %c0_43, %c0_44] : memref<1x4x8x128xf32, #tpu.memory_space<vmem>>, vector<1x1x8x128xf32>
      %91 = vector.shape_cast %90 : vector<1x1x8x128xf32> to vector<8x128xf32>
      %92 = arith.addf %91, %74 : vector<8x128xf32>
      %c0_45 = arith.constant 0 : index
      %c2_46 = arith.constant 2 : index
      %c0_47 = arith.constant 0 : index
      %c0_48 = arith.constant 0 : index
      %93 = vector.load %arg4[%c0_45, %c2_46, %c0_47, %c0_48] : memref<1x4x8x128xf32, #tpu.memory_space<vmem>>, vector<1x1x8x128xf32>
      %94 = vector.shape_cast %93 : vector<1x1x8x128xf32> to vector<8x128xf32>
      %95 = vector.shape_cast %92 : vector<8x128xf32> to vector<1x1x8x128xf32>
      tpu.vector_store %arg4[%c0_45, %c2_46, %c0_47, %c0_48], %95 {strides = array<i32>} : memref<1x4x8x128xf32, #tpu.memory_space<vmem>>, vector<1x1x8x128xf32>,
      %c0_49 = arith.constant 0 : index
      %c3 = arith.constant 3 : index
      %c0_50 = arith.constant 0 : index
      %c0_51 = arith.constant 0 : index
      %96 = vector.load %arg4[%c0_49, %c3, %c0_50, %c0_51] : memref<1x4x8x128xf32, #tpu.memory_space<vmem>>, vector<1x1x8x128xf32>
      %97 = vector.shape_cast %96 : vector<1x1x8x128xf32> to vector<8x128xf32>
      %98 = arith.addf %97, %77 : vector<8x128xf32>
      %c0_52 = arith.constant 0 : index
      %c3_53 = arith.constant 3 : index
      %c0_54 = arith.constant 0 : index
      %c0_55 = arith.constant 0 : index
      %99 = vector.load %arg4[%c0_52, %c3_53, %c0_54, %c0_55] : memref<1x4x8x128xf32, #tpu.memory_space<vmem>>, vector<1x1x8x128xf32>
      %100 = vector.shape_cast %99 : vector<1x1x8x128xf32> to vector<8x128xf32>
      %101 = vector.shape_cast %98 : vector<8x128xf32> to vector<1x1x8x128xf32>
      tpu.vector_store %arg4[%c0_52, %c3_53, %c0_54, %c0_55], %101 {strides = array<i32>} : memref<1x4x8x128xf32, #tpu.memory_space<vmem>>, vector<1x1x8x128xf32>,
    } else {
    }
    return
  }
  func.func @transform_0(%arg0: i32, %arg1: i32) -> (i32, i32) {
    %c1_i32 = arith.constant 1 : i32
    %0 = arith.muli %arg0, %c1_i32 : i32
    %1 = arith.addi %0, %arg1 : i32
    %c0_i32 = arith.constant 0 : i32
    %2 = arith.minsi %1, %c0_i32 : i32
    %c0_i32_0 = arith.constant 0 : i32
    %c0_i32_1 = arith.constant 0 : i32
    return %2, %c0_i32_0 : i32, i32
  }
  func.func @transform_1(%arg0: i32, %arg1: i32) -> (i32, i32) {
    %c1_i32 = arith.constant 1 : i32
    %0 = arith.muli %arg0, %c1_i32 : i32
    %1 = arith.addi %0, %arg1 : i32
    %c0_i32 = arith.constant 0 : i32
    %2 = arith.minsi %1, %c0_i32 : i32
    %c0_i32_0 = arith.constant 0 : i32
    %c0_i32_1 = arith.constant 0 : i32
    return %2, %c0_i32_0 : i32, i32
  }
  func.func @transform_2(%arg0: i32, %arg1: i32) -> (i32, i32, i32, i32) {
    %c0_i32 = arith.constant 0 : i32
    %c0_i32_0 = arith.constant 0 : i32
    %c0_i32_1 = arith.constant 0 : i32
    %c0_i32_2 = arith.constant 0 : i32
    return %arg0, %c0_i32, %c0_i32_0, %c0_i32_1 : i32, i32, i32, i32
  }
}

</mosaic_0001>

<llo_original>
// kernel: dice_bce_loss.1
$region0: #{dice_bce_loss.1}
  #allocation0 [shape = 'u32[]', space=smem, size = 0x4, offset = 0x4, fixed_abs, tag = 'smem constant byte address 0x4 - core index']
  #allocation1 [shape = 'u32[144,128]{1,0:T(1,128)}', space=vmem, size = 0x12000, scoped, tag = 'internal scratch']
  %s0 = inlined_call_operand.vmem [shape: f32[64,128], index: 0, kind: input, shape index: {}]
  %s1 = inlined_call_operand.vmem [shape: f32[64,128], index: 1, kind: input, shape index: {}]
  %s2 = inlined_call_operand.vmem [shape: f32[1,4,8,128], index: 2, kind: output, shape index: {}]
  %s3 = sld [smem:[#allocation0]]
  $region30: #{dice_bce_loss.1} parent=0
    _
  %s5 = ssub.s32 1, %s3
  %s6 = scalar_select 0, %s5, %s3
  // Predicated region
  $region2: #{dice_bce_loss.1} parent=0 // pred_check
    _
  $region3: #{dice_bce_loss.1} parent=0 // pred_check_branch
    %8 = sbr.rel (0) target = $region5
  $region4: #{dice_bce_loss.1} parent=0 // pred_region
    %s9 = sadd.s32 0, 0
    %p10 = scmp.lt.s32.totalorder %s9, 0
    %s11 = scalar_select %p10, %s9, 0
    %s12 = smul.u32 8, %s11
    %p13 = scmp.lt.s32.totalorder %s12, 7
    %s14 = scalar_select %p13, %s12, 7
    %s15 = smul.addr %s14, 8
    %s16 = scalar_lea.vmem %s0, %s15
    %s17 = sadd.s32 0, 0
    %p18 = scmp.lt.s32.totalorder %s17, 0
    %s19 = scalar_select %p18, %s17, 0
    %s20 = smul.u32 8, %s19
  $region5: #{dice_bce_loss.1} parent=0 // pred_fallthru
    _
  // Predicated region
  $region6: #{dice_bce_loss.1} parent=0 // pred_check
    _
  $region7: #{dice_bce_loss.1} parent=0 // pred_check_branch
    %22 = sbr.rel (0) target = $region9
  $region8: #{dice_bce_loss.1} parent=0 // pred_region
    %s23 = sadd.s32 0, 0
    %p24 = scmp.lt.s32.totalorder %s23, 0
    %s25 = scalar_select %p24, %s23, 0
    %s26 = smul.u32 8, %s25
    %p27 = scmp.lt.s32.totalorder %s26, 7
    %s28 = scalar_select %p27, %s26, 7
    %s29 = smul.addr %s28, 8
    %s30 = scalar_lea.vmem %s1, %s29
    %s31 = sadd.s32 0, 0
    %p32 = scmp.lt.s32.totalorder %s31, 0
    %s33 = scalar_select %p32, %s31, 0
    %s34 = smul.u32 8, %s33
  $region9: #{dice_bce_loss.1} parent=0 // pred_fallthru
    _
  %s35 = sadd.s32 0, 0
  %p36 = scmp.lt.s32.totalorder %s35, 0
  %s37 = scalar_select %p36, %s35, 0
  %s38 = smul.u32 8, %s37
  %p39 = scmp.lt.s32.totalorder %s38, 7
  %s40 = scalar_select %p39, %s38, 7
  %s41 = smul.addr %s40, 8
  %s42 = scalar_lea.vmem %s0, %s41
  %s43 = sadd.s32 0, 0
  %p44 = scmp.lt.s32.totalorder %s43, 0
  %s45 = scalar_select %p44, %s43, 0
  %s46 = smul.u32 8, %s45
  %p47 = scmp.lt.s32.totalorder %s46, 7
  %s48 = scalar_select %p47, %s46, 7
  %s49 = smul.addr %s48, 8
  %s50 = scalar_lea.vmem %s1, %s49
  %s51 = sadd.s32 0, 0
  %p52 = scmp.lt.s32.totalorder %s51, 0
  %s53 = scalar_select %p52, %s51, 0
  %s54 = smul.u32 8, %s53
  %p55 = scmp.lt.s32.totalorder %s54, 7
  %s56 = scalar_select %p55, %s54, 7
  %s57 = smul.addr %s56, 8
  %s58 = scalar_lea.vmem %s0, %s57
  %s59 = sadd.s32 0, 0
  %p60 = scmp.lt.s32.totalorder %s59, 0
  %s61 = scalar_select %p60, %s59, 0
  %s62 = smul.u32 8, %s61
  %s63 = sadd.s32 0, 0
  %p64 = scmp.lt.s32.totalorder %s63, 0
  %s65 = scalar_select %p64, %s63, 0
  %s66 = smul.u32 8, %s65
  %p67 = scmp.lt.s32.totalorder %s66, 7
  %s68 = scalar_select %p67, %s66, 7
  %s69 = smul.addr %s68, 8
  %s70 = scalar_lea.vmem %s1, %s69
  %s71 = sadd.s32 0, 0
  %p72 = scmp.lt.s32.totalorder %s71, 0
  %s73 = scalar_select %p72, %s71, 0
  %s74 = smul.u32 8, %s73
  %p75 = scmp.eq.s32.totalorder 0, 0
  // Predicated region
  $region10: #{dice_bce_loss.1} parent=0 // pred_check
    %p76 = pneg %p75
  $region11: #{dice_bce_loss.1} parent=0 // pred_check_branch
    %78 = sbr.rel (%p76) target = $region13
  $region12: #{dice_bce_loss.1} parent=0 // pred_region
    %79 = vst [vmem:[%s2] sm:$0xff] 0.0
    %80 = vst [vmem:[%s2 + $0x8] sm:$0xff] 0.0
    %81 = vst [vmem:[%s2 + $0x10] sm:$0xff] 0.0
    %82 = vst [vmem:[%s2 + $0x18] sm:$0xff] 0.0
  $region13: #{dice_bce_loss.1} parent=0 // pred_fallthru
    _
  %s83 = sadd.s32 0, 0
  %s84 = smul.u32 %s83, 64
  %s85 = ssub.s32 64, %s84
  %p86 = scmp.ge.s32.totalorder %s85, 64
  // Predicated region
  $region14: #{dice_bce_loss.1} parent=0 // pred_check
    %p87 = pneg %p86
  $region15: #{dice_bce_loss.1} parent=0 // pred_check_branch
    %89 = sbr.rel (%p87) target = $region17
  $region16: #{dice_bce_loss.1} parent=0 // pred_region
    %v90 = vld [vmem:[%s58] sm:$0xff]
    %v91 = vld [vmem:[%s58 + $0x8] sm:$0xff]
    %v92 = vld [vmem:[%s58 + $0x10] sm:$0xff]
    %v93 = vld [vmem:[%s58 + $0x18] sm:$0xff]
    %v94 = vld [vmem:[%s58 + $0x20] sm:$0xff]
    %v95 = vld [vmem:[%s58 + $0x28] sm:$0xff]
    %v96 = vld [vmem:[%s58 + $0x30] sm:$0xff]
    %v97 = vld [vmem:[%s58 + $0x38] sm:$0xff]
    %v98 = vld [vmem:[%s70] sm:$0xff]
    %v99 = vld [vmem:[%s70 + $0x8] sm:$0xff]
    %v100 = vld [vmem:[%s70 + $0x10] sm:$0xff]
    %v101 = vld [vmem:[%s70 + $0x18] sm:$0xff]
    %v102 = vld [vmem:[%s70 + $0x20] sm:$0xff]
    %v103 = vld [vmem:[%s70 + $0x28] sm:$0xff]
    %v104 = vld [vmem:[%s70 + $0x30] sm:$0xff]
    %v105 = vld [vmem:[%s70 + $0x38] sm:$0xff]
    %v106 = vand.u32 2147483647, %v90
    %v107 = vand.u32 2147483647, %v91
    %v108 = vand.u32 2147483647, %v92
    %v109 = vand.u32 2147483647, %v93
    %v110 = vand.u32 2147483647, %v94
    %v111 = vand.u32 2147483647, %v95
    %v112 = vand.u32 2147483647, %v96
    %v113 = vand.u32 2147483647, %v97
    %v114 = vsub.f32 0.0, %v106
    %v115 = vsub.f32 0.0, %v107
    %v116 = vsub.f32 0.0, %v108
    %v117 = vsub.f32 0.0, %v109
    %v118 = vsub.f32 0.0, %v110
    %v119 = vsub.f32 0.0, %v111
    %v120 = vsub.f32 0.0, %v112
    %v121 = vsub.f32 0.0, %v113
    %v122 = vmul.f32 %v114, 1.442695
    %v123 = vpow.pop %v122
    %v124 = vmul.f32 %v115, 1.442695
    %v125 = vpow.pop %v124
    %v126 = vmul.f32 %v116, 1.442695
    %v127 = vpow.pop %v126
    %v128 = vmul.f32 %v117, 1.442695
    %v129 = vpow.pop %v128
    %v130 = vmul.f32 %v118, 1.442695
    %v131 = vpow.pop %v130
    %v132 = vmul.f32 %v119, 1.442695
    %v133 = vpow.pop %v132
    %v134 = vmul.f32 %v120, 1.442695
    %v135 = vpow.pop %v134
    %v136 = vmul.f32 %v121, 1.442695
    %v137 = vpow.pop %v136
    %v138 = vadd.f32 %v123, 1.0
    %v139 = vadd.f32 %v125, 1.0
    %v140 = vadd.f32 %v127, 1.0
    %v141 = vadd.f32 %v129, 1.0
    %v142 = vadd.f32 %v131, 1.0
    %v143 = vadd.f32 %v133, 1.0
    %v144 = vadd.f32 %v135, 1.0
    %v145 = vadd.f32 %v137, 1.0
    %v146 = vrcp.pop %v138
    %v147 = vrcp.pop %v139
    %v148 = vrcp.pop %v140
    %v149 = vrcp.pop %v141
    %v150 = vrcp.pop %v142
    %v151 = vrcp.pop %v143
    %v152 = vrcp.pop %v144
    %v153 = vrcp.pop %v145
    %v154 = vmul.f32 %v138, %v146
    %v155 = vmul.f32 %v139, %v147
    %v156 = vmul.f32 %v140, %v148
    %v157 = vmul.f32 %v141, %v149
    %v158 = vmul.f32 %v142, %v150
    %v159 = vmul.f32 %v143, %v151
    %v160 = vmul.f32 %v144, %v152
    %v161 = vmul.f32 %v145, %v153
    %v162 = vsub.f32 2.0, %v154
    %v163 = vsub.f32 2.0, %v155
    %v164 = vsub.f32 2.0, %v156
    %v165 = vsub.f32 2.0, %v157
    %v166 = vsub.f32 2.0, %v158
    %v167 = vsub.f32 2.0, %v159
    %v168 = vsub.f32 2.0, %v160
    %v169 = vsub.f32 2.0, %v161
    %v170 = vmul.f32 %v146, %v162
    %v171 = vmul.f32 %v147, %v163
    %v172 = vmul.f32 %v148, %v164
    %v173 = vmul.f32 %v149, %v165
    %v174 = vmul.f32 %v150, %v166
    %v175 = vmul.f32 %v151, %v167
    %v176 = vmul.f32 %v152, %v168
    %v177 = vmul.f32 %v153, %v169
    %vm178 = vcmp.ge.f32.partialorder %v90, 0.0
    %vm179 = vcmp.ge.f32.partialorder %v91, 0.0
    %vm180 = vcmp.ge.f32.partialorder %v92, 0.0
    %vm181 = vcmp.ge.f32.partialorder %v93, 0.0
    %vm182 = vcmp.ge.f32.partialorder %v94, 0.0
    %vm183 = vcmp.ge.f32.partialorder %v95, 0.0
    %vm184 = vcmp.ge.f32.partialorder %v96, 0.0
    %vm185 = vcmp.ge.f32.partialorder %v97, 0.0
    %v186 = vsel %vm178, 1.0, %v123
    %v187 = vsel %vm179, 1.0, %v125
    %v188 = vsel %vm180, 1.0, %v127
    %v189 = vsel %vm181, 1.0, %v129
    %v190 = vsel %vm182, 1.0, %v131
    %v191 = vsel %vm183, 1.0, %v133
    %v192 = vsel %vm184, 1.0, %v135
    %v193 = vsel %vm185, 1.0, %v137
    %v194 = vmul.f32 %v186, %v170
    %v195 = vmul.f32 %v187, %v171
    %v196 = vmul.f32 %v188, %v172
    %v197 = vmul.f32 %v189, %v173
    %v198 = vmul.f32 %v190, %v174
    %v199 = vmul.f32 %v191, %v175
    %v200 = vmul.f32 %v192, %v176
    %v201 = vmul.f32 %v193, %v177
    %v202 = vadd.f32 %v123, 1.0
    %v203 = vlog2.pop %v202
    %v204 = vmul.f32 %v203, 0.6931472
    %v205 = vmul.f32 -0.5, %v123
    %v206 = vadd.f32 %v205, 1.0
    %v207 = vmul.f32 %v206, %v123
    %v208 = vand.u32 2147483647, %v123
    %vm209 = vcmp.lt.f32.partialorder %v208, 0.0004427343
    %v210 = vsel %vm209, %v207, %v204
    %v211 = vadd.f32 %v125, 1.0
    %v212 = vlog2.pop %v211
    %v213 = vmul.f32 %v212, 0.6931472
    %v214 = vmul.f32 -0.5, %v125
    %v215 = vadd.f32 %v214, 1.0
    %v216 = vmul.f32 %v215, %v125
    %v217 = vand.u32 2147483647, %v125
    %vm218 = vcmp.lt.f32.partialorder %v217, 0.0004427343
    %v219 = vsel %vm218, %v216, %v213
    %v220 = vadd.f32 %v127, 1.0
    %v221 = vlog2.pop %v220
    %v222 = vmul.f32 %v221, 0.6931472
    %v223 = vmul.f32 -0.5, %v127
    %v224 = vadd.f32 %v223, 1.0
    %v225 = vmul.f32 %v224, %v127
    %v226 = vand.u32 2147483647, %v127
    %vm227 = vcmp.lt.f32.partialorder %v226, 0.0004427343
    %v228 = vsel %vm227, %v225, %v222
    %v229 = vadd.f32 %v129, 1.0
    %v230 = vlog2.pop %v229
    %v231 = vmul.f32 %v230, 0.6931472
    %v232 = vmul.f32 -0.5, %v129
    %v233 = vadd.f32 %v232, 1.0
    %v234 = vmul.f32 %v233, %v129
    %v235 = vand.u32 2147483647, %v129
    %vm236 = vcmp.lt.f32.partialorder %v235, 0.0004427343
    %v237 = vsel %vm236, %v234, %v231
    %v238 = vadd.f32 %v131, 1.0
    %v239 = vlog2.pop %v238
    %v240 = vmul.f32 %v239, 0.6931472
    %v241 = vmul.f32 -0.5, %v131
    %v242 = vadd.f32 %v241, 1.0
    %v243 = vmul.f32 %v242, %v131
    %v244 = vand.u32 2147483647, %v131
    %vm245 = vcmp.lt.f32.partialorder %v244, 0.0004427343
    %v246 = vsel %vm245, %v243, %v240
    %v247 = vadd.f32 %v133, 1.0
    %v248 = vlog2.pop %v247
    %v249 = vmul.f32 %v248, 0.6931472
    %v250 = vmul.f32 -0.5, %v133
    %v251 = vadd.f32 %v250, 1.0
    %v252 = vmul.f32 %v251, %v133
    %v253 = vand.u32 2147483647, %v133
    %vm254 = vcmp.lt.f32.partialorder %v253, 0.0004427343
    %v255 = vsel %vm254, %v252, %v249
    %v256 = vadd.f32 %v135, 1.0
    %v257 = vlog2.pop %v256
    %v258 = vmul.f32 %v257, 0.6931472
    %v259 = vmul.f32 -0.5, %v135
    %v260 = vadd.f32 %v259, 1.0
    %v261 = vmul.f32 %v260, %v135
    %v262 = vand.u32 2147483647, %v135
    %vm263 = vcmp.lt.f32.partialorder %v262, 0.0004427343
    %v264 = vsel %vm263, %v261, %v258
    %v265 = vadd.f32 %v137, 1.0
    %v266 = vlog2.pop %v265
    %v267 = vmul.f32 %v266, 0.6931472
    %v268 = vmul.f32 -0.5, %v137
    %v269 = vadd.f32 %v268, 1.0
    %v270 = vmul.f32 %v269, %v137
    %v271 = vand.u32 2147483647, %v137
    %vm272 = vcmp.lt.f32.partialorder %v271, 0.0004427343
    %v273 = vsel %vm272, %v270, %v267
    %v274 = vmin.f32 %v90, 0.0
    %v275 = vmin.f32 %v91, 0.0
    %v276 = vmin.f32 %v92, 0.0
    %v277 = vmin.f32 %v93, 0.0
    %v278 = vmin.f32 %v94, 0.0
    %v279 = vmin.f32 %v95, 0.0
    %v280 = vmin.f32 %v96, 0.0
    %v281 = vmin.f32 %v97, 0.0
    %v282 = vsub.f32 %v274, %v210
    %v283 = vsub.f32 %v275, %v219
    %v284 = vsub.f32 %v276, %v228
    %v285 = vsub.f32 %v277, %v237
    %v286 = vsub.f32 %v278, %v246
    %v287 = vsub.f32 %v279, %v255
    %v288 = vsub.f32 %v280, %v264
    %v289 = vsub.f32 %v281, %v273
    %v290 = vmax.f32 %v90, 0.0
    %v291 = vmax.f32 %v91, 0.0
    %v292 = vmax.f32 %v92, 0.0
    %v293 = vmax.f32 %v93, 0.0
    %v294 = vmax.f32 %v94, 0.0
    %v295 = vmax.f32 %v95, 0.0
    %v296 = vmax.f32 %v96, 0.0
    %v297 = vmax.f32 %v97, 0.0
    %v298 = vsub.f32 0.0, %v290
    %v299 = vsub.f32 0.0, %v291
    %v300 = vsub.f32 0.0, %v292
    %v301 = vsub.f32 0.0, %v293
    %v302 = vsub.f32 0.0, %v294
    %v303 = vsub.f32 0.0, %v295
    %v304 = vsub.f32 0.0, %v296
    %v305 = vsub.f32 0.0, %v297
    %v306 = vsub.f32 %v298, %v210
    %v307 = vsub.f32 %v299, %v219
    %v308 = vsub.f32 %v300, %v228
    %v309 = vsub.f32 %v301, %v237
    %v310 = vsub.f32 %v302, %v246
    %v311 = vsub.f32 %v303, %v255
    %v312 = vsub.f32 %v304, %v264
    %v313 = vsub.f32 %v305, %v273
    %v314 = vmax.f32 %v282, -100.0
    %v315 = vmax.f32 %v283, -100.0
    %v316 = vmax.f32 %v284, -100.0
    %v317 = vmax.f32 %v285, -100.0
    %v318 = vmax.f32 %v286, -100.0
    %v319 = vmax.f32 %v287, -100.0
    %v320 = vmax.f32 %v288, -100.0
    %v321 = vmax.f32 %v289, -100.0
    %v322 = vmul.f32 %v98, %v314
    %v323 = vmul.f32 %v99, %v315
    %v324 = vmul.f32 %v100, %v316
    %v325 = vmul.f32 %v101, %v317
    %v326 = vmul.f32 %v102, %v318
    %v327 = vmul.f32 %v103, %v319
    %v328 = vmul.f32 %v104, %v320
    %v329 = vmul.f32 %v105, %v321
    %v330 = vsub.f32 1.0, %v98
    %v331 = vsub.f32 1.0, %v99
    %v332 = vsub.f32 1.0, %v100
    %v333 = vsub.f32 1.0, %v101
    %v334 = vsub.f32 1.0, %v102
    %v335 = vsub.f32 1.0, %v103
    %v336 = vsub.f32 1.0, %v104
    %v337 = vsub.f32 1.0, %v105
    %v338 = vmax.f32 %v306, -100.0
    %v339 = vmax.f32 %v307, -100.0
    %v340 = vmax.f32 %v308, -100.0
    %v341 = vmax.f32 %v309, -100.0
    %v342 = vmax.f32 %v310, -100.0
    %v343 = vmax.f32 %v311, -100.0
    %v344 = vmax.f32 %v312, -100.0
    %v345 = vmax.f32 %v313, -100.0
    %v346 = vmul.f32 %v330, %v338
    %v347 = vmul.f32 %v331, %v339
    %v348 = vmul.f32 %v332, %v340
    %v349 = vmul.f32 %v333, %v341
    %v350 = vmul.f32 %v334, %v342
    %v351 = vmul.f32 %v335, %v343
    %v352 = vmul.f32 %v336, %v344
    %v353 = vmul.f32 %v337, %v345
    %v354 = vadd.f32 %v322, %v346
    %v355 = vadd.f32 %v323, %v347
    %v356 = vadd.f32 %v324, %v348
    %v357 = vadd.f32 %v325, %v349
    %v358 = vadd.f32 %v326, %v350
    %v359 = vadd.f32 %v327, %v351
    %v360 = vadd.f32 %v328, %v352
    %v361 = vadd.f32 %v329, %v353
    %v362 = vsub.f32 0.0, %v354
    %v363 = vsub.f32 0.0, %v355
    %v364 = vsub.f32 0.0, %v356
    %v365 = vsub.f32 0.0, %v357
    %v366 = vsub.f32 0.0, %v358
    %v367 = vsub.f32 0.0, %v359
    %v368 = vsub.f32 0.0, %v360
    %v369 = vsub.f32 0.0, %v361
    %v370 = vmul.f32 %v194, %v98
    %v371 = vmul.f32 %v195, %v99
    %v372 = vmul.f32 %v196, %v100
    %v373 = vmul.f32 %v197, %v101
    %v374 = vmul.f32 %v198, %v102
    %v375 = vmul.f32 %v199, %v103
    %v376 = vmul.f32 %v200, %v104
    %v377 = vmul.f32 %v201, %v105
    %v378 = vadd.f32 %v370, %v371
    %v379 = vadd.f32 %v378, %v372
    %v380 = vadd.f32 %v379, %v373
    %v381 = vadd.f32 %v380, %v374
    %v382 = vadd.f32 %v381, %v375
    %v383 = vadd.f32 %v382, %v376
    %v384 = vadd.f32 %v383, %v377
    %v385 = vadd.f32 %v384, 0.0
    %v386 = vadd.f32 %v194, %v195
    %v387 = vadd.f32 %v386, %v196
    %v388 = vadd.f32 %v387, %v197
    %v389 = vadd.f32 %v388, %v198
    %v390 = vadd.f32 %v389, %v199
    %v391 = vadd.f32 %v390, %v200
    %v392 = vadd.f32 %v391, %v201
    %v393 = vadd.f32 %v392, 0.0
    %v394 = vadd.f32 %v98, %v99
    %v395 = vadd.f32 %v394, %v100
    %v396 = vadd.f32 %v395, %v101
    %v397 = vadd.f32 %v396, %v102
    %v398 = vadd.f32 %v397, %v103
    %v399 = vadd.f32 %v398, %v104
    %v400 = vadd.f32 %v399, %v105
    %v401 = vadd.f32 %v400, 0.0
    %v402 = vadd.f32 %v362, %v363
    %v403 = vadd.f32 %v402, %v364
    %v404 = vadd.f32 %v403, %v365
    %v405 = vadd.f32 %v404, %v366
    %v406 = vadd.f32 %v405, %v367
    %v407 = vadd.f32 %v406, %v368
    %v408 = vadd.f32 %v407, %v369
    %v409 = vadd.f32 %v408, 0.0
    %v410 = vld [vmem:[%s2] sm:$0xff]
    %v411 = vadd.f32 %v410, %v385
    %412 = vst [vmem:[%s2] sm:$0xff] %v411
    %s413 = scalar_lea.vmem %s2, 8
    %v414 = vld [vmem:[%s413] sm:$0xff]
    %v415 = vadd.f32 %v414, %v393
    %416 = vst [vmem:[%s413] sm:$0xff] %v415
    %s417 = scalar_lea.vmem %s2, 16
    %v418 = vld [vmem:[%s417] sm:$0xff]
    %v419 = vadd.f32 %v418, %v401
    %420 = vst [vmem:[%s417] sm:$0xff] %v419
    %s421 = scalar_lea.vmem %s2, 24
    %v422 = vld [vmem:[%s421] sm:$0xff]
    %v423 = vadd.f32 %v422, %v409
    %424 = vst [vmem:[%s421] sm:$0xff] %v423
  $region17: #{dice_bce_loss.1} parent=0 // pred_fallthru
    _
  %p425 = scmp.lt.s32.totalorder %s85, 64
  // Predicated region
  $region18: #{dice_bce_loss.1} parent=0 // pred_check
    %p426 = pneg %p425
  $region19: #{dice_bce_loss.1} parent=0 // pred_check_branch
    %428 = sbr.rel (%p426) target = $region21
  $region20: #{dice_bce_loss.1} parent=0 // pred_region
    %v429 = vld [vmem:[%s58] sm:$0xff]
    %v430 = vld [vmem:[%s58 + $0x8] sm:$0xff]
    %v431 = vld [vmem:[%s58 + $0x10] sm:$0xff]
    %v432 = vld [vmem:[%s58 + $0x18] sm:$0xff]
    %v433 = vld [vmem:[%s58 + $0x20] sm:$0xff]
    %v434 = vld [vmem:[%s58 + $0x28] sm:$0xff]
    %v435 = vld [vmem:[%s58 + $0x30] sm:$0xff]
    %v436 = vld [vmem:[%s58 + $0x38] sm:$0xff]
    %v437 = vld [vmem:[%s70] sm:$0xff]
    %v438 = vld [vmem:[%s70 + $0x8] sm:$0xff]
    %v439 = vld [vmem:[%s70 + $0x10] sm:$0xff]
    %v440 = vld [vmem:[%s70 + $0x18] sm:$0xff]
    %v441 = vld [vmem:[%s70 + $0x20] sm:$0xff]
    %v442 = vld [vmem:[%s70 + $0x28] sm:$0xff]
    %v443 = vld [vmem:[%s70 + $0x30] sm:$0xff]
    %v444 = vld [vmem:[%s70 + $0x38] sm:$0xff]
    %v445 = vlaneseq
    %v446 = vshrl.u32 %v445, 7
    %v447 = vadd.s32 %v446, 8
    %v448 = vadd.s32 %v446, 16
    %v449 = vadd.s32 %v446, 24
    %v450 = vadd.s32 %v446, 32
    %v451 = vadd.s32 %v446, 40
    %v452 = vadd.s32 %v446, 48
    %v453 = vadd.s32 %v446, 56
    %v454 = vstv 0
    %v455 = vadd.s32 %v454, %v446
    %v456 = vadd.s32 %v454, %v447
    %v457 = vadd.s32 %v454, %v448
    %v458 = vadd.s32 %v454, %v449
    %v459 = vadd.s32 %v454, %v450
    %v460 = vadd.s32 %v454, %v451
    %v461 = vadd.s32 %v454, %v452
    %v462 = vadd.s32 %v454, %v453
    %v463 = vstv %s85
    %vm464 = vcmp.lt.s32.totalorder %v455, %v463
    %vm465 = vcmp.lt.s32.totalorder %v456, %v463
    %vm466 = vcmp.lt.s32.totalorder %v457, %v463
    %vm467 = vcmp.lt.s32.totalorder %v458, %v463
    %vm468 = vcmp.lt.s32.totalorder %v459, %v463
    %vm469 = vcmp.lt.s32.totalorder %v460, %v463
    %vm470 = vcmp.lt.s32.totalorder %v461, %v463
    %vm471 = vcmp.lt.s32.totalorder %v462, %v463
    %v472 = vsel %vm464, %v429, -100.0
    %v473 = vsel %vm465, %v430, -100.0
    %v474 = vsel %vm466, %v431, -100.0
    %v475 = vsel %vm467, %v432, -100.0
    %v476 = vsel %vm468, %v433, -100.0
    %v477 = vsel %vm469, %v434, -100.0
    %v478 = vsel %vm470, %v435, -100.0
    %v479 = vsel %vm471, %v436, -100.0
    %v480 = vsel %vm464, %v437, 0.0
    %v481 = vsel %vm465, %v438, 0.0
    %v482 = vsel %vm466, %v439, 0.0
    %v483 = vsel %vm467, %v440, 0.0
    %v484 = vsel %vm468, %v441, 0.0
    %v485 = vsel %vm469, %v442, 0.0
    %v486 = vsel %vm470, %v443, 0.0
    %v487 = vsel %vm471, %v444, 0.0
    %v488 = vand.u32 2147483647, %v472
    %v489 = vand.u32 2147483647, %v473
    %v490 = vand.u32 2147483647, %v474
    %v491 = vand.u32 2147483647, %v475
    %v492 = vand.u32 2147483647, %v476
    %v493 = vand.u32 2147483647, %v477
    %v494 = vand.u32 2147483647, %v478
    %v495 = vand.u32 2147483647, %v479
    %v496 = vsub.f32 0.0, %v488
    %v497 = vsub.f32 0.0, %v489
    %v498 = vsub.f32 0.0, %v490
    %v499 = vsub.f32 0.0, %v491
    %v500 = vsub.f32 0.0, %v492
    %v501 = vsub.f32 0.0, %v493
    %v502 = vsub.f32 0.0, %v494
    %v503 = vsub.f32 0.0, %v495
    %v504 = vmul.f32 %v496, 1.442695
    %v505 = vpow.pop %v504
    %v506 = vmul.f32 %v497, 1.442695
    %v507 = vpow.pop %v506
    %v508 = vmul.f32 %v498, 1.442695
    %v509 = vpow.pop %v508
    %v510 = vmul.f32 %v499, 1.442695
    %v511 = vpow.pop %v510
    %v512 = vmul.f32 %v500, 1.442695
    %v513 = vpow.pop %v512
    %v514 = vmul.f32 %v501, 1.442695
    %v515 = vpow.pop %v514
    %v516 = vmul.f32 %v502, 1.442695
    %v517 = vpow.pop %v516
    %v518 = vmul.f32 %v503, 1.442695
    %v519 = vpow.pop %v518
    %v520 = vadd.f32 %v505, 1.0
    %v521 = vadd.f32 %v507, 1.0
    %v522 = vadd.f32 %v509, 1.0
    %v523 = vadd.f32 %v511, 1.0
    %v524 = vadd.f32 %v513, 1.0
    %v525 = vadd.f32 %v515, 1.0
    %v526 = vadd.f32 %v517, 1.0
    %v527 = vadd.f32 %v519, 1.0
    %v528 = vrcp.pop %v520
    %v529 = vrcp.pop %v521
    %v530 = vrcp.pop %v522
    %v531 = vrcp.pop %v523
    %v532 = vrcp.pop %v524
    %v533 = vrcp.pop %v525
    %v534 = vrcp.pop %v526
    %v535 = vrcp.pop %v527
    %v536 = vmul.f32 %v520, %v528
    %v537 = vmul.f32 %v521, %v529
    %v538 = vmul.f32 %v522, %v530
    %v539 = vmul.f32 %v523, %v531
    %v540 = vmul.f32 %v524, %v532
    %v541 = vmul.f32 %v525, %v533
    %v542 = vmul.f32 %v526, %v534
    %v543 = vmul.f32 %v527, %v535
    %v544 = vsub.f32 2.0, %v536
    %v545 = vsub.f32 2.0, %v537
    %v546 = vsub.f32 2.0, %v538
    %v547 = vsub.f32 2.0, %v539
    %v548 = vsub.f32 2.0, %v540
    %v549 = vsub.f32 2.0, %v541
    %v550 = vsub.f32 2.0, %v542
    %v551 = vsub.f32 2.0, %v543
    %v552 = vmul.f32 %v528, %v544
    %v553 = vmul.f32 %v529, %v545
    %v554 = vmul.f32 %v530, %v546
    %v555 = vmul.f32 %v531, %v547
    %v556 = vmul.f32 %v532, %v548
    %v557 = vmul.f32 %v533, %v549
    %v558 = vmul.f32 %v534, %v550
    %v559 = vmul.f32 %v535, %v551
    %vm560 = vcmp.ge.f32.partialorder %v472, 0.0
    %vm561 = vcmp.ge.f32.partialorder %v473, 0.0
    %vm562 = vcmp.ge.f32.partialorder %v474, 0.0
    %vm563 = vcmp.ge.f32.partialorder %v475, 0.0
    %vm564 = vcmp.ge.f32.partialorder %v476, 0.0
    %vm565 = vcmp.ge.f32.partialorder %v477, 0.0
    %vm566 = vcmp.ge.f32.partialorder %v478, 0.0
    %vm567 = vcmp.ge.f32.partialorder %v479, 0.0
    %v568 = vsel %vm560, 1.0, %v505
    %v569 = vsel %vm561, 1.0, %v507
    %v570 = vsel %vm562, 1.0, %v509
    %v571 = vsel %vm563, 1.0, %v511
    %v572 = vsel %vm564, 1.0, %v513
    %v573 = vsel %vm565, 1.0, %v515
    %v574 = vsel %vm566, 1.0, %v517
    %v575 = vsel %vm567, 1.0, %v519
    %v576 = vmul.f32 %v568, %v552
    %v577 = vmul.f32 %v569, %v553
    %v578 = vmul.f32 %v570, %v554
    %v579 = vmul.f32 %v571, %v555
    %v580 = vmul.f32 %v572, %v556
    %v581 = vmul.f32 %v573, %v557
    %v582 = vmul.f32 %v574, %v558
    %v583 = vmul.f32 %v575, %v559
    %v584 = vadd.f32 %v505, 1.0
    %v585 = vlog2.pop %v584
    %v586 = vmul.f32 %v585, 0.6931472
    %v587 = vmul.f32 -0.5, %v505
    %v588 = vadd.f32 %v587, 1.0
    %v589 = vmul.f32 %v588, %v505
    %v590 = vand.u32 2147483647, %v505
    %vm591 = vcmp.lt.f32.partialorder %v590, 0.0004427343
    %v592 = vsel %vm591, %v589, %v586
    %v593 = vadd.f32 %v507, 1.0
    %v594 = vlog2.pop %v593
    %v595 = vmul.f32 %v594, 0.6931472
    %v596 = vmul.f32 -0.5, %v507
    %v597 = vadd.f32 %v596, 1.0
    %v598 = vmul.f32 %v597, %v507
    %v599 = vand.u32 2147483647, %v507
    %vm600 = vcmp.lt.f32.partialorder %v599, 0.0004427343
    %v601 = vsel %vm600, %v598, %v595
    %v602 = vadd.f32 %v509, 1.0
    %v603 = vlog2.pop %v602
    %v604 = vmul.f32 %v603, 0.6931472
    %v605 = vmul.f32 -0.5, %v509
    %v606 = vadd.f32 %v605, 1.0
    %v607 = vmul.f32 %v606, %v509
    %v608 = vand.u32 2147483647, %v509
    %vm609 = vcmp.lt.f32.partialorder %v608, 0.0004427343
    %v610 = vsel %vm609, %v607, %v604
    %v611 = vadd.f32 %v511, 1.0
    %v612 = vlog2.pop %v611
    %v613 = vmul.f32 %v612, 0.6931472
    %v614 = vmul.f32 -0.5, %v511
    %v615 = vadd.f32 %v614, 1.0
    %v616 = vmul.f32 %v615, %v511
    %v617 = vand.u32 2147483647, %v511
    %vm618 = vcmp.lt.f32.partialorder %v617, 0.0004427343
    %v619 = vsel %vm618, %v616, %v613
    %v620 = vadd.f32 %v513, 1.0
    %v621 = vlog2.pop %v620
    %v622 = vmul.f32 %v621, 0.6931472
    %v623 = vmul.f32 -0.5, %v513
    %v624 = vadd.f32 %v623, 1.0
    %v625 = vmul.f32 %v624, %v513
    %v626 = vand.u32 2147483647, %v513
    %vm627 = vcmp.lt.f32.partialorder %v626, 0.0004427343
    %v628 = vsel %vm627, %v625, %v622
    %v629 = vadd.f32 %v515, 1.0
    %v630 = vlog2.pop %v629
    %v631 = vmul.f32 %v630, 0.6931472
    %v632 = vmul.f32 -0.5, %v515
    %v633 = vadd.f32 %v632, 1.0
    %v634 = vmul.f32 %v633, %v515
    %v635 = vand.u32 2147483647, %v515
    %vm636 = vcmp.lt.f32.partialorder %v635, 0.0004427343
    %v637 = vsel %vm636, %v634, %v631
    %v638 = vadd.f32 %v517, 1.0
    %v639 = vlog2.pop %v638
    %v640 = vmul.f32 %v639, 0.6931472
    %v641 = vmul.f32 -0.5, %v517
    %v642 = vadd.f32 %v641, 1.0
    %v643 = vmul.f32 %v642, %v517
    %v644 = vand.u32 2147483647, %v517
    %vm645 = vcmp.lt.f32.partialorder %v644, 0.0004427343
    %v646 = vsel %vm645, %v643, %v640
    %v647 = vadd.f32 %v519, 1.0
    %v648 = vlog2.pop %v647
    %v649 = vmul.f32 %v648, 0.6931472
    %v650 = vmul.f32 -0.5, %v519
    %v651 = vadd.f32 %v650, 1.0
    %v652 = vmul.f32 %v651, %v519
    %v653 = vand.u32 2147483647, %v519
    %vm654 = vcmp.lt.f32.partialorder %v653, 0.0004427343
    %v655 = vsel %vm654, %v652, %v649
    %v656 = vmin.f32 %v472, 0.0
    %v657 = vmin.f32 %v473, 0.0
    %v658 = vmin.f32 %v474, 0.0
    %v659 = vmin.f32 %v475, 0.0
    %v660 = vmin.f32 %v476, 0.0
    %v661 = vmin.f32 %v477, 0.0
    %v662 = vmin.f32 %v478, 0.0
    %v663 = vmin.f32 %v479, 0.0
    %v664 = vsub.f32 %v656, %v592
    %v665 = vsub.f32 %v657, %v601
    %v666 = vsub.f32 %v658, %v610
    %v667 = vsub.f32 %v659, %v619
    %v668 = vsub.f32 %v660, %v628
    %v669 = vsub.f32 %v661, %v637
    %v670 = vsub.f32 %v662, %v646
    %v671 = vsub.f32 %v663, %v655
    %v672 = vmax.f32 %v472, 0.0
    %v673 = vmax.f32 %v473, 0.0
    %v674 = vmax.f32 %v474, 0.0
    %v675 = vmax.f32 %v475, 0.0
    %v676 = vmax.f32 %v476, 0.0
    %v677 = vmax.f32 %v477, 0.0
    %v678 = vmax.f32 %v478, 0.0
    %v679 = vmax.f32 %v479, 0.0
    %v680 = vsub.f32 0.0, %v672
    %v681 = vsub.f32 0.0, %v673
    %v682 = vsub.f32 0.0, %v674
    %v683 = vsub.f32 0.0, %v675
    %v684 = vsub.f32 0.0, %v676
    %v685 = vsub.f32 0.0, %v677
    %v686 = vsub.f32 0.0, %v678
    %v687 = vsub.f32 0.0, %v679
    %v688 = vsub.f32 %v680, %v592
    %v689 = vsub.f32 %v681, %v601
    %v690 = vsub.f32 %v682, %v610
    %v691 = vsub.f32 %v683, %v619
    %v692 = vsub.f32 %v684, %v628
    %v693 = vsub.f32 %v685, %v637
    %v694 = vsub.f32 %v686, %v646
    %v695 = vsub.f32 %v687, %v655
    %v696 = vmax.f32 %v664, -100.0
    %v697 = vmax.f32 %v665, -100.0
    %v698 = vmax.f32 %v666, -100.0
    %v699 = vmax.f32 %v667, -100.0
    %v700 = vmax.f32 %v668, -100.0
    %v701 = vmax.f32 %v669, -100.0
    %v702 = vmax.f32 %v670, -100.0
    %v703 = vmax.f32 %v671, -100.0
    %v704 = vmul.f32 %v480, %v696
    %v705 = vmul.f32 %v481, %v697
    %v706 = vmul.f32 %v482, %v698
    %v707 = vmul.f32 %v483, %v699
    %v708 = vmul.f32 %v484, %v700
    %v709 = vmul.f32 %v485, %v701
    %v710 = vmul.f32 %v486, %v702
    %v711 = vmul.f32 %v487, %v703
    %v712 = vsub.f32 1.0, %v480
    %v713 = vsub.f32 1.0, %v481
    %v714 = vsub.f32 1.0, %v482
    %v715 = vsub.f32 1.0, %v483
    %v716 = vsub.f32 1.0, %v484
    %v717 = vsub.f32 1.0, %v485
    %v718 = vsub.f32 1.0, %v486
    %v719 = vsub.f32 1.0, %v487
    %v720 = vmax.f32 %v688, -100.0
    %v721 = vmax.f32 %v689, -100.0
    %v722 = vmax.f32 %v690, -100.0
    %v723 = vmax.f32 %v691, -100.0
    %v724 = vmax.f32 %v692, -100.0
    %v725 = vmax.f32 %v693, -100.0
    %v726 = vmax.f32 %v694, -100.0
    %v727 = vmax.f32 %v695, -100.0
    %v728 = vmul.f32 %v712, %v720
    %v729 = vmul.f32 %v713, %v721
    %v730 = vmul.f32 %v714, %v722
    %v731 = vmul.f32 %v715, %v723
    %v732 = vmul.f32 %v716, %v724
    %v733 = vmul.f32 %v717, %v725
    %v734 = vmul.f32 %v718, %v726
    %v735 = vmul.f32 %v719, %v727
    %v736 = vadd.f32 %v704, %v728
    %v737 = vadd.f32 %v705, %v729
    %v738 = vadd.f32 %v706, %v730
    %v739 = vadd.f32 %v707, %v731
    %v740 = vadd.f32 %v708, %v732
    %v741 = vadd.f32 %v709, %v733
    %v742 = vadd.f32 %v710, %v734
    %v743 = vadd.f32 %v711, %v735
    %v744 = vsub.f32 0.0, %v736
    %v745 = vsub.f32 0.0, %v737
    %v746 = vsub.f32 0.0, %v738
    %v747 = vsub.f32 0.0, %v739
    %v748 = vsub.f32 0.0, %v740
    %v749 = vsub.f32 0.0, %v741
    %v750 = vsub.f32 0.0, %v742
    %v751 = vsub.f32 0.0, %v743
    %v752 = vmul.f32 %v576, %v480
    %v753 = vmul.f32 %v577, %v481
    %v754 = vmul.f32 %v578, %v482
    %v755 = vmul.f32 %v579, %v483
    %v756 = vmul.f32 %v580, %v484
    %v757 = vmul.f32 %v581, %v485
    %v758 = vmul.f32 %v582, %v486
    %v759 = vmul.f32 %v583, %v487
    %v760 = vadd.f32 %v752, %v753
    %v761 = vadd.f32 %v760, %v754
    %v762 = vadd.f32 %v761, %v755
    %v763 = vadd.f32 %v762, %v756
    %v764 = vadd.f32 %v763, %v757
    %v765 = vadd.f32 %v764, %v758
    %v766 = vadd.f32 %v765, %v759
    %v767 = vadd.f32 %v766, 0.0
    %v768 = vadd.f32 %v576, %v577
    %v769 = vadd.f32 %v768, %v578
    %v770 = vadd.f32 %v769, %v579
    %v771 = vadd.f32 %v770, %v580
    %v772 = vadd.f32 %v771, %v581
    %v773 = vadd.f32 %v772, %v582
    %v774 = vadd.f32 %v773, %v583
    %v775 = vadd.f32 %v774, 0.0
    %v776 = vadd.f32 %v480, %v481
    %v777 = vadd.f32 %v776, %v482
    %v778 = vadd.f32 %v777, %v483
    %v779 = vadd.f32 %v778, %v484
    %v780 = vadd.f32 %v779, %v485
    %v781 = vadd.f32 %v780, %v486
    %v782 = vadd.f32 %v781, %v487
    %v783 = vadd.f32 %v782, 0.0
    %v784 = vadd.f32 %v744, %v745
    %v785 = vadd.f32 %v784, %v746
    %v786 = vadd.f32 %v785, %v747
    %v787 = vadd.f32 %v786, %v748
    %v788 = vadd.f32 %v787, %v749
    %v789 = vadd.f32 %v788, %v750
    %v790 = vadd.f32 %v789, %v751
    %v791 = vadd.f32 %v790, 0.0
    %v792 = vld [vmem:[%s2] sm:$0xff]
    %v793 = vadd.f32 %v792, %v767
    %794 = vst [vmem:[%s2] sm:$0xff] %v793
    %s795 = scalar_lea.vmem %s2, 8
    %v796 = vld [vmem:[%s795] sm:$0xff]
    %v797 = vadd.f32 %v796, %v775
    %798 = vst [vmem:[%s795] sm:$0xff] %v797
    %s799 = scalar_lea.vmem %s2, 16
    %v800 = vld [vmem:[%s799] sm:$0xff]
    %v801 = vadd.f32 %v800, %v783
    %802 = vst [vmem:[%s799] sm:$0xff] %v801
    %s803 = scalar_lea.vmem %s2, 24
    %v804 = vld [vmem:[%s803] sm:$0xff]
    %v805 = vadd.f32 %v804, %v791
    %806 = vst [vmem:[%s803] sm:$0xff] %v805
  $region21: #{dice_bce_loss.1} parent=0 // pred_fallthru
    _
  // Predicated region
  $region22: #{dice_bce_loss.1} parent=0 // pred_check
    _
  $region23: #{dice_bce_loss.1} parent=0 // pred_check_branch
    %808 = sbr.rel (0) target = $region25
  $region24: #{dice_bce_loss.1} parent=0 // pred_region
    _
  $region25: #{dice_bce_loss.1} parent=0 // pred_fallthru
    _
  // Predicated region
  $region26: #{dice_bce_loss.1} parent=0 // pred_check
    _
  $region27: #{dice_bce_loss.1} parent=0 // pred_check_branch
    %810 = sbr.rel (0) target = $region29
  $region28: #{dice_bce_loss.1} parent=0 // pred_region
    _
  $region29: #{dice_bce_loss.1} parent=0 // pred_fallthru
    _

</llo_original>
